<compile_context>
chip_gen: v6e
topology: v6e:2x2x1
jax: 0.10.0
libtpu: 0.0.40
codegen_flags: <defaults>
</compile_context>

<pallas_src>
import jax
import jax.numpy as jnp
from jax.experimental import pallas as pl
from jax.experimental.pallas import tpu as pltpu


_ROW_GROUP = 8  # rows of the T tile processed per inner (static) step


def _joint_kernel(enc_ref, pred_ref, we_ref, wp_ref, bj_ref, wo_ref, bo_ref,
                  out_ref):
    # enc_ref : [1, tT, E]  bf16      pred_ref: [1, U, P] bf16
    # we_ref  : [E, H] bf16           wp_ref  : [P, H] bf16
    # bj_ref  : [1, H] f32  (encoder bias + prediction bias folded)
    # wo_ref  : [H, Vp] bf16          bo_ref  : [1, Vp] f32
    # out_ref : [1, tT, U, Vp] f32
    enc = enc_ref[0]                          # [tT, E]
    pred = pred_ref[0]                        # [U, P]

    # Small projections, recomputed per T-tile (negligible vs. the joint matmul).
    enc_p = jnp.dot(enc, we_ref[...],
                    preferred_element_type=jnp.float32)            # [tT, H]
    pred_p = jnp.dot(pred, wp_ref[...],
                     preferred_element_type=jnp.float32) + bj_ref[...]  # [U, H]

    wo = wo_ref[...]                          # [H, Vp] bf16
    bo = bo_ref[...]                          # [1, Vp] f32

    t_tile = enc_p.shape[0]
    u_len, hid = pred_p.shape

    def do_rows(lo, n_rows):
        rows = enc_p[lo:lo + n_rows]                              # [n, H]
        z = rows[:, None, :] + pred_p[None, :, :]                 # [n, U, H] f32
        h = jnp.maximum(z, 0.0)                                   # ReLU (f32 VPU)
        # TODO(synk): dropout is identity here (inference); training-mode
        # dropout would use pltpu.prng_seed / pltpu.stateful_bernoulli.
        h2 = h.reshape(n_rows * u_len, hid).astype(jnp.bfloat16)
        o = jnp.dot(h2, wo, preferred_element_type=jnp.float32) + bo
        out_ref[0, lo:lo + n_rows] = (
            o.reshape(n_rows, u_len, -1).astype(out_ref.dtype))

    group = min(_ROW_GROUP, t_tile)
    n_full = t_tile // group
    for g in range(n_full):                   # static, fully unrolled
        do_rows(g * group, group)
    rem = t_tile - n_full * group
    if rem:
        do_rows(n_full * group, rem)


def _vmem_limit_bytes():
    """Scoped VMEM budget: half the physical capacity, capped at 64 MiB."""
    try:
        cap = int(pltpu.get_tpu_info().vmem_capacity_bytes)
    except Exception:
        cap = 64 * 1024 * 1024
    return int(min(cap // 2, 64 * 1024 * 1024))


def _choose_t_tile(T, U, Vp, vmem_budget):
    """Largest T tile whose double-buffered output block fits ~half the budget."""
    out_bytes_per_row = 2 * U * Vp * 4        # double-buffered f32 output rows
    target = max(8, min(128, (vmem_budget // 2) // max(out_bytes_per_row, 1)))
    if T <= target:
        return T
    for cand in range(int(target), 7, -1):    # prefer multiples of 8 dividing T
        if T % cand == 0 and cand % 8 == 0:
            return cand
    return T


def min_joint(encoder_output, prediction_output, params):
    """encoder_output: [B, T, E], prediction_output: [B, U, P] -> [B, T, U, V]."""
    we, be = params["we"], params["be"]
    wp, bp = params["wp"], params["bp"]
    wo, bo = params["wo"], params["bo"]

    B, T, E = encoder_output.shape
    _, U, P = prediction_output.shape
    H = we.shape[1]
    V = wo.shape[1]

    # Lane-dense output: pad the vocab dim to a multiple of 128, slice outside.
    Vp = 128 * pl.cdiv(V, 128)
    if Vp != V:
        wo = jnp.pad(wo, ((0, 0), (0, Vp - V)))
        bo = jnp.pad(bo, ((0, 0), (0, Vp - V)))

    # bf16 matmul operands; f32 accumulation stays on the MXU.
    enc_b = encoder_output.astype(jnp.bfloat16)
    pred_b = prediction_output.astype(jnp.bfloat16)
    we_b = we.astype(jnp.bfloat16)
    wp_b = wp.astype(jnp.bfloat16)
    wo_b = wo.astype(jnp.bfloat16)

    # Fold the two projection biases (z = enc_p + pred_p, so one add suffices).
    bj = (be + bp).astype(jnp.float32)        # [1, H]
    bo_f = bo.astype(jnp.float32)             # [1, Vp]

    vmem_limit = _vmem_limit_bytes()
    tT = _choose_t_tile(T, U, Vp, vmem_limit)
    nT = T // tT

    grid_spec = pltpu.PrefetchScalarGridSpec(
        num_scalar_prefetch=0,
        grid=(B, nT),
        in_specs=[
            pl.BlockSpec((1, tT, E), lambda b, t: (b, t, 0)),
            pl.BlockSpec((1, U, P), lambda b, t: (b, 0, 0)),
            pl.BlockSpec((E, H), lambda b, t: (0, 0)),
            pl.BlockSpec((P, H), lambda b, t: (0, 0)),
            pl.BlockSpec((1, H), lambda b, t: (0, 0)),
            pl.BlockSpec((H, Vp), lambda b, t: (0, 0)),
            pl.BlockSpec((1, Vp), lambda b, t: (0, 0)),
        ],
        out_specs=pl.BlockSpec((1, tT, U, Vp), lambda b, t: (b, t, 0, 0)),
    )

    flops = 2 * B * (T * U * H * Vp + T * E * H + U * P * H)
    bytes_accessed = (B * T * U * Vp * 4            # output writeback
                      + B * T * E * 2 + B * U * P * 2
                      + (E * H + P * H + H * Vp) * 2
                      + (H + Vp) * 4)
    cost = pl.CostEstimate(flops=flops, transcendentals=0,
                           bytes_accessed=bytes_accessed)

    out_padded = pl.pallas_call(
        _joint_kernel,
        out_shape=jax.ShapeDtypeStruct((B, T, U, Vp), jnp.float32),
        grid_spec=grid_spec,
        compiler_params=pltpu.CompilerParams(
            dimension_semantics=("parallel", "parallel"),
            vmem_limit_bytes=vmem_limit),
        cost_estimate=cost,
    )(enc_b, pred_b, we_b, wp_b, bj, wo_b, bo_f)

    return out_padded[..., :V]


def min_joint_ref(encoder_output, prediction_output, params):
    """Pure-JAX reference mirroring the PyTorch forward (bf16 matmul operands,
    f32 accumulation, to match the kernel's arithmetic)."""
    bf16, f32 = jnp.bfloat16, jnp.float32
    enc_p = jnp.dot(encoder_output.astype(bf16), params["we"].astype(bf16),
                    preferred_element_type=f32) + params["be"][0]     # [B, T, H]
    pred_p = jnp.dot(prediction_output.astype(bf16), params["wp"].astype(bf16),
                     preferred_element_type=f32) + params["bp"][0]    # [B, U, H]
    z = enc_p[:, :, None, :] + pred_p[:, None, :, :]                  # [B, T, U, H]
    h = jnp.maximum(z, 0.0)
    return jnp.dot(h.astype(bf16), params["wo"].astype(bf16),
                   preferred_element_type=f32) + params["bo"][0]      # [B, T, U, V]


if __name__ == "__main__":
    # Small, deterministic shapes.
    B, T, U = 2, 8, 8
    E, P, H, V = 32, 24, 32, 16

    key = jax.random.PRNGKey(0)
    ks = jax.random.split(key, 8)

    encoder_output = jax.random.normal(ks[0], (B, T, E), dtype=jnp.float32)
    prediction_output = jax.random.normal(ks[1], (B, U, P), dtype=jnp.float32)

    params = {
        "we": jax.random.normal(ks[2], (E, H), dtype=jnp.float32) * 0.1,
        "be": jax.random.normal(ks[3], (1, H), dtype=jnp.float32) * 0.1,
        "wp": jax.random.normal(ks[4], (P, H), dtype=jnp.float32) * 0.1,
        "bp": jax.random.normal(ks[5], (1, H), dtype=jnp.float32) * 0.1,
        "wo": jax.random.normal(ks[6], (H, V), dtype=jnp.float32) * 0.1,
        "bo": jax.random.normal(ks[7], (1, V), dtype=jnp.float32) * 0.1,
    }

    out = min_joint(encoder_output, prediction_output, params)
    out = jax.block_until_ready(out)

    ref = min_joint_ref(encoder_output, prediction_output, params)
    assert out.shape == (B, T, U, V), out.shape
    max_err = float(jnp.max(jnp.abs(out - ref)))
    assert max_err < 1e-2, max_err

    print("KERNEL_OK")
</pallas_src>

<mosaic_0001>
module attributes {stable_mosaic.version = 11 : i64} {
  func.func @_joint_kernel(%arg0: i32, %arg1: i32, %arg2: memref<1x8x32xbf16, #tpu.memory_space<vmem>>, %arg3: memref<1x8x24xbf16, #tpu.memory_space<vmem>>, %arg4: memref<32x32xbf16, #tpu.memory_space<vmem>>, %arg5: memref<24x32xbf16, #tpu.memory_space<vmem>>, %arg6: memref<1x32xf32, #tpu.memory_space<vmem>>, %arg7: memref<32x128xbf16, #tpu.memory_space<vmem>>, %arg8: memref<1x128xf32, #tpu.memory_space<vmem>>, %arg9: memref<1x8x8x128xf32, #tpu.memory_space<vmem>>) attributes {dimension_semantics = [#tpu.dimension_semantics<parallel>, #tpu.dimension_semantics<parallel>], iteration_bounds = array<i64: 2, 1>, scalar_prefetch = 0 : i64, scratch_operands = 0 : i64, tpu.core_type = #tpu.core_type<tc>, window_params = [{transform_indices = @transform_0, window_bounds = array<i64: 1, 8, 32>}, {transform_indices = @transform_1, window_bounds = array<i64: 1, 8, 24>}, {pipeline_mode = #tpu.pipeline_mode<synchronous>, transform_indices = @transform_2, window_bounds = array<i64: 32, 32>}, {pipeline_mode = #tpu.pipeline_mode<synchronous>, transform_indices = @transform_3, window_bounds = array<i64: 24, 32>}, {pipeline_mode = #tpu.pipeline_mode<synchronous>, transform_indices = @transform_4, window_bounds = array<i64: 1, 32>}, {pipeline_mode = #tpu.pipeline_mode<synchronous>, transform_indices = @transform_5, window_bounds = array<i64: 32, 128>}, {pipeline_mode = #tpu.pipeline_mode<synchronous>, transform_indices = @transform_6, window_bounds = array<i64: 1, 128>}, {transform_indices = @transform_7, window_bounds = array<i64: 1, 8, 8, 128>}]} {
    %c0 = arith.constant 0 : index
    %c0_0 = arith.constant 0 : index
    %c0_1 = arith.constant 0 : index
    %0 = vector.load %arg2[%c0, %c0_0, %c0_1] : memref<1x8x32xbf16, #tpu.memory_space<vmem>>, vector<1x8x32xbf16>
    %1 = vector.shape_cast %0 : vector<1x8x32xbf16> to vector<8x32xbf16>
    %c0_2 = arith.constant 0 : index
    %c0_3 = arith.constant 0 : index
    %c0_4 = arith.constant 0 : index
    %2 = vector.load %arg3[%c0_2, %c0_3, %c0_4] : memref<1x8x24xbf16, #tpu.memory_space<vmem>>, vector<1x8x24xbf16>
    %3 = vector.shape_cast %2 : vector<1x8x24xbf16> to vector<8x24xbf16>
    %c0_5 = arith.constant 0 : index
    %c0_6 = arith.constant 0 : index
    %4 = vector.load %arg4[%c0_5, %c0_6] : memref<32x32xbf16, #tpu.memory_space<vmem>>, vector<32x32xbf16>
    %cst = arith.constant dense<0.000000e+00> : vector<8x32xf32>
    %5 = tpu.matmul %1, %4, %cst {dimension_numbers = #tpu.dot_dimension_numbers<[1], [0], [0], [1], [0, 0, 1, 1], [], []>} : vector<8x32xbf16>, vector<32x32xbf16>, vector<8x32xf32> -> vector<8x32xf32>
    %c0_7 = arith.constant 0 : index
    %c0_8 = arith.constant 0 : index
    %6 = vector.load %arg5[%c0_7, %c0_8] : memref<24x32xbf16, #tpu.memory_space<vmem>>, vector<24x32xbf16>
    %cst_9 = arith.constant dense<0.000000e+00> : vector<8x32xf32>
    %7 = tpu.matmul %3, %6, %cst_9 {dimension_numbers = #tpu.dot_dimension_numbers<[1], [0], [0], [1], [0, 0, 1, 1], [], []>} : vector<8x24xbf16>, vector<24x32xbf16>, vector<8x32xf32> -> vector<8x32xf32>
    %c0_10 = arith.constant 0 : index
    %c0_11 = arith.constant 0 : index
    %8 = vector.load %arg6[%c0_10, %c0_11] : memref<1x32xf32, #tpu.memory_space<vmem>>, vector<1x32xf32>
    %9 = vector.broadcast %8 : vector<1x32xf32> to vector<8x32xf32>
    %10 = arith.addf %7, %9 : vector<8x32xf32>
    %c0_12 = arith.constant 0 : index
    %c0_13 = arith.constant 0 : index
    %11 = vector.load %arg7[%c0_12, %c0_13] : memref<32x128xbf16, #tpu.memory_space<vmem>>, vector<32x128xbf16>
    %c0_14 = arith.constant 0 : index
    %c0_15 = arith.constant 0 : index
    %12 = vector.load %arg8[%c0_14, %c0_15] : memref<1x128xf32, #tpu.memory_space<vmem>>, vector<1x128xf32>
    %13 = vector.shape_cast %5 : vector<8x32xf32> to vector<8x1x32xf32>
    %14 = vector.shape_cast %10 : vector<8x32xf32> to vector<1x8x32xf32>
    %15 = vector.broadcast %13 : vector<8x1x32xf32> to vector<8x8x32xf32>
    %16 = vector.broadcast %14 : vector<1x8x32xf32> to vector<8x8x32xf32>
    %17 = arith.addf %15, %16 : vector<8x8x32xf32>
    %cst_16 = arith.constant 0.000000e+00 : f32
    %18 = vector.broadcast %cst_16 : f32 to vector<8x8x32xf32>
    %19 = arith.maximumf %17, %18 : vector<8x8x32xf32>
    %20 = vector.shape_cast %19 : vector<8x8x32xf32> to vector<64x32xf32>
    %21 = arith.truncf %20 : vector<64x32xf32> to vector<64x32xbf16>
    %cst_17 = arith.constant dense<0.000000e+00> : vector<64x128xf32>
    %22 = tpu.matmul %21, %11, %cst_17 {dimension_numbers = #tpu.dot_dimension_numbers<[1], [0], [0], [1], [0, 0, 1, 1], [], []>} : vector<64x32xbf16>, vector<32x128xbf16>, vector<64x128xf32> -> vector<64x128xf32>
    %23 = vector.broadcast %12 : vector<1x128xf32> to vector<64x128xf32>
    %24 = arith.addf %22, %23 : vector<64x128xf32>
    %25 = vector.shape_cast %24 : vector<64x128xf32> to vector<8x8x128xf32>
    %c0_18 = arith.constant 0 : index
    %c0_19 = arith.constant 0 : index
    %c0_20 = arith.constant 0 : index
    %c0_21 = arith.constant 0 : index
    %26 = vector.load %arg9[%c0_18, %c0_19, %c0_20, %c0_21] : memref<1x8x8x128xf32, #tpu.memory_space<vmem>>, vector<1x8x8x128xf32>
    %27 = vector.shape_cast %26 : vector<1x8x8x128xf32> to vector<8x8x128xf32>
    %28 = vector.shape_cast %25 : vector<8x8x128xf32> to vector<1x8x8x128xf32>
    tpu.vector_store %arg9[%c0_18, %c0_19, %c0_20, %c0_21], %28 {strides = array<i32>} : memref<1x8x8x128xf32, #tpu.memory_space<vmem>>, vector<1x8x8x128xf32>,
    return
  }
  func.func @transform_0(%arg0: i32, %arg1: i32) -> (i32, i32, i32) {
    %c0_i32 = arith.constant 0 : i32
    %c0_i32_0 = arith.constant 0 : i32
    return %arg0, %arg1, %c0_i32 : i32, i32, i32
  }
  func.func @transform_1(%arg0: i32, %arg1: i32) -> (i32, i32, i32) {
    %c0_i32 = arith.constant 0 : i32
    %c0_i32_0 = arith.constant 0 : i32
    %c0_i32_1 = arith.constant 0 : i32
    return %arg0, %c0_i32, %c0_i32_0 : i32, i32, i32
  }
  func.func @transform_2(%arg0: i32, %arg1: i32) -> (i32, i32) {
    %c0_i32 = arith.constant 0 : i32
    %c0_i32_0 = arith.constant 0 : i32
    %c0_i32_1 = arith.constant 0 : i32
    return %c0_i32, %c0_i32_0 : i32, i32
  }
  func.func @transform_3(%arg0: i32, %arg1: i32) -> (i32, i32) {
    %c0_i32 = arith.constant 0 : i32
    %c0_i32_0 = arith.constant 0 : i32
    %c0_i32_1 = arith.constant 0 : i32
    return %c0_i32, %c0_i32_0 : i32, i32
  }
  func.func @transform_4(%arg0: i32, %arg1: i32) -> (i32, i32) {
    %c0_i32 = arith.constant 0 : i32
    %c0_i32_0 = arith.constant 0 : i32
    %c0_i32_1 = arith.constant 0 : i32
    return %c0_i32, %c0_i32_0 : i32, i32
  }
  func.func @transform_5(%arg0: i32, %arg1: i32) -> (i32, i32) {
    %c0_i32 = arith.constant 0 : i32
    %c0_i32_0 = arith.constant 0 : i32
    %c0_i32_1 = arith.constant 0 : i32
    return %c0_i32, %c0_i32_0 : i32, i32
  }
  func.func @transform_6(%arg0: i32, %arg1: i32) -> (i32, i32) {
    %c0_i32 = arith.constant 0 : i32
    %c0_i32_0 = arith.constant 0 : i32
    %c0_i32_1 = arith.constant 0 : i32
    return %c0_i32, %c0_i32_0 : i32, i32
  }
  func.func @transform_7(%arg0: i32, %arg1: i32) -> (i32, i32, i32, i32) {
    %c0_i32 = arith.constant 0 : i32
    %c0_i32_0 = arith.constant 0 : i32
    %c0_i32_1 = arith.constant 0 : i32
    return %arg0, %arg1, %c0_i32, %c0_i32_0 : i32, i32, i32, i32
  }
}

</mosaic_0001>

<llo_original>
// kernel: tpu_custom_call.1
$region0: #{tpu_custom_call.1}
  #allocation0 [shape = 'u32[]', space=smem, size = 0x4, offset = 0x4, fixed_abs, tag = 'smem constant byte address 0x4 - core index']
  #allocation1 [shape = 'u32[144,128]{1,0:T(1,128)}', space=vmem, size = 0x12000, scoped, tag = 'internal scratch']
  %s0 = inlined_call_operand.hbm [shape: bf16[2,8,32], index: 0, kind: input, shape index: {}]
  %s1 = inlined_call_operand.hbm [shape: bf16[2,8,24], index: 1, kind: input, shape index: {}]
  %s2 = inlined_call_operand.hbm [shape: bf16[32,32], index: 2, kind: input, shape index: {}]
  %s3 = inlined_call_operand.hbm [shape: bf16[24,32], index: 3, kind: input, shape index: {}]
  %s4 = inlined_call_operand.vmem [shape: f32[1,32], index: 4, kind: input, shape index: {}]
  %s5 = inlined_call_operand.hbm [shape: bf16[32,128], index: 5, kind: input, shape index: {}]
  %s6 = inlined_call_operand.vmem [shape: f32[1,128], index: 6, kind: input, shape index: {}]
  %s7 = inlined_call_operand.hbm [shape: f32[2,8,8,128], index: 7, kind: output, shape index: {}]
  %s8 = sld [smem:[#allocation0]]
  $region81: #{tpu_custom_call.1} parent=0
    _
  %s10 = ssub.s32 1, %s8
  %s11 = scalar_select 0, %s10, %s8
  $region1: #{tpu_custom_call.1} parent=0
    #allocation2 [shape = 'u8[4096]{0}', space=vmem, size = 0x1000, scoped, tag = 'input window, operand 0']
    #allocation3 [shape = 's32[2]{0}', space=sflag, size = 0x8, scoped, tag = 'scoped memory for tpu_custom_call.1']
    #allocation4 [shape = 's32[2]{0}', space=sflag, size = 0x8, scoped, tag = 'scoped memory for tpu_custom_call.1']
    #allocation5 [shape = 'u8[4096]{0}', space=vmem, size = 0x1000, scoped, tag = 'input window, operand 1']
    #allocation6 [shape = 's32[2]{0}', space=sflag, size = 0x8, scoped, tag = 'scoped memory for tpu_custom_call.1']
    #allocation7 [shape = 'u8[8192]{0}', space=vmem, size = 0x2000, scoped, tag = 'input window, operand 2, single buffered']
    #allocation8 [shape = 'u8[6144]{0}', space=vmem, size = 0x1800, scoped, tag = 'input window, operand 3, single buffered']
    #allocation9 [shape = 's32[1]{0}', space=sflag, size = 0x4, scoped, tag = 'scoped memory for tpu_custom_call.1']
    #allocation10 [shape = 'u8[8192]{0}', space=vmem, size = 0x2000, scoped, tag = 'input window, operand 5, single buffered']
    #allocation11 [shape = 'u8[65536]{0}', space=vmem, size = 0x10000, scoped, tag = 'output window, operand 0']
    %12 = vsyncpa [#allocation3], 0
    %s13 = scalar_lea.sflag [#allocation3], 1
    %14 = vsyncpa %s13, 0
    %15 = vsyncpa [#allocation6], 0
    %s16 = scalar_lea.sflag [#allocation6], 1
    %17 = vsyncpa %s16, 0
    %18 = vsyncpa [#allocation9], 0
    %19 = vsyncpa [#allocation4], 0
    %s20 = scalar_lea.sflag [#allocation4], 1
    %21 = vsyncpa %s20, 0
    loop: start=0, step=1, limit=4
    $region2: #{tpu_custom_call.1} parent=1 // loop_pre_header
      _
    $region3: #{tpu_custom_call.1} parent=1 // loop_header
      %s23 = sphi 0, %s27
      %p24 = scmp.ge.s32.totalorder %s23, 4
      %s30 = sphi 0, %s42
      %s31 = sphi 0, %s38
      %s32 = sphi 0, %s30
      %s33 = sphi 0, %s31
      %s34 = sphi 0, %s32
      %s35 = sphi 0, %s33
      %s47 = sphi 0, %s49
      %s50 = sphi 0, %s47
      %s51 = sphi 0, %s50
      %s67 = sphi 0, %s51
      %s73 = sphi 0, %s75
      %s76 = sphi 0, %s73
      %s77 = sphi 0, %s76
      %s93 = sphi 0, %s77
      %s97 = sphi 0, %s97
      %s99 = sphi 0, %s97
      %s100 = sphi 0, %s99
      %s114 = sphi 0, %s100
      %s118 = sphi 0, %s118
      %s120 = sphi 0, %s118
      %s121 = sphi 0, %s120
      %s135 = sphi 0, %s121
      %s139 = sphi 0, %s139
      %s141 = sphi 0, %s139
      %s142 = sphi 0, %s141
      %s156 = sphi 0, %s142
      %s160 = sphi 0, %s160
      %s162 = sphi 0, %s160
      %s163 = sphi 0, %s162
      %s177 = sphi 0, %s163
      %s181 = sphi 0, %s181
      %s183 = sphi 0, %s181
      %s184 = sphi 0, %s183
      %s198 = sphi 0, %s184
      %s206 = sphi 0, %s208
      %s209 = sphi 0, %s206
      %s210 = sphi 0, %s209
      %s226 = sphi 0, %s210
    $region4: #{tpu_custom_call.1} parent=1 // loop_header_branch
      %26 = sbr.rel (%p24) target = $region8
    $region5: #{tpu_custom_call.1} parent=1 // loop_body
      %s28 = ssub.s32 %s23, 1
      %s29 = ssub.s32 %s23, 2
      %s36 = sadd.s32 1, %s31
      %p37 = scmp.ge.s32.totalorder %s36, 1
      %s38 = scalar_select %p37, 0, %s36
      %s39 = sadd.s32 1, %s30
      %s40 = scalar_select %p37, %s39, %s30
      %p41 = scmp.ge.s32.totalorder %s40, 2
      %s42 = scalar_select %p41, 0, %s40
      %s43 = ssub.s32 %s30, %s42
      %s44 = ssub.s32 %s31, %s38
      %s45 = sor.u32 %s43, %s44
      %p46 = scmp.eq.s32.totalorder %s45, 0
      %s48 = sadd.s32 %s47, 1
      %s49 = scalar_select %p46, %s47, %s48
      %p52 = pneg %p46
      %p53 = scmp.eq.s32.totalorder %s23, 1
      %p54 = por %p52, %p53
      %p55 = scmp.ne.s32.totalorder %s47, %s50
      %p56 = scmp.eq.s32.totalorder %s23, 0
      %p57 = por %p55, %p56
      %p58 = scmp.ne.s32.totalorder %s47, %s50
      %p59 = scmp.eq.s32.totalorder %s28, 1
      %p60 = por %p58, %p59
      %p61 = scmp.ne.s32.totalorder %s50, %s51
      %p62 = scmp.eq.s32.totalorder %s28, 0
      %p63 = por %p61, %p62
      %p64 = scmp.ne.s32.totalorder %s50, %s51
      %p65 = scmp.eq.s32.totalorder %s29, 1
      %p66 = por %p64, %p65
      %p68 = scmp.ne.s32.totalorder %s51, %s67
      %p69 = scmp.eq.s32.totalorder %s29, 0
      %p70 = por %p68, %p69
      %s71 = ssub.s32 %s30, %s42
      %p72 = scmp.eq.s32.totalorder %s71, 0
      %s74 = sadd.s32 %s73, 1
      %s75 = scalar_select %p72, %s73, %s74
      %p78 = pneg %p72
      %p79 = scmp.eq.s32.totalorder %s23, 1
      %p80 = por %p78, %p79
      %p81 = scmp.ne.s32.totalorder %s73, %s76
      %p82 = scmp.eq.s32.totalorder %s23, 0
      %p83 = por %p81, %p82
      %p84 = scmp.ne.s32.totalorder %s73, %s76
      %p85 = scmp.eq.s32.totalorder %s28, 1
      %p86 = por %p84, %p85
      %p87 = scmp.ne.s32.totalorder %s76, %s77
      %p88 = scmp.eq.s32.totalorder %s28, 0
      %p89 = por %p87, %p88
      %p90 = scmp.ne.s32.totalorder %s76, %s77
      %p91 = scmp.eq.s32.totalorder %s29, 1
      %p92 = por %p90, %p91
      %p94 = scmp.ne.s32.totalorder %s77, %s93
      %p95 = scmp.eq.s32.totalorder %s29, 0
      %p96 = por %p94, %p95
      %s98 = sadd.s32 %s97, 1
      %p101 = scmp.eq.s32.totalorder %s23, 1
      %p102 = scmp.ne.s32.totalorder %s97, %s99
      %p103 = scmp.eq.s32.totalorder %s23, 0
      %p104 = por %p102, %p103
      %p105 = scmp.ne.s32.totalorder %s97, %s99
      %p106 = scmp.eq.s32.totalorder %s28, 1
      %p107 = por %p105, %p106
      %p108 = scmp.ne.s32.totalorder %s99, %s100
      %p109 = scmp.eq.s32.totalorder %s28, 0
      %p110 = por %p108, %p109
      %p111 = scmp.ne.s32.totalorder %s99, %s100
      %p112 = scmp.eq.s32.totalorder %s29, 1
      %p113 = por %p111, %p112
      %p115 = scmp.ne.s32.totalorder %s100, %s114
      %p116 = scmp.eq.s32.totalorder %s29, 0
      %p117 = por %p115, %p116
      %s119 = sadd.s32 %s118, 1
      %p122 = scmp.eq.s32.totalorder %s23, 1
      %p123 = scmp.ne.s32.totalorder %s118, %s120
      %p124 = scmp.eq.s32.totalorder %s23, 0
      %p125 = por %p123, %p124
      %p126 = scmp.ne.s32.totalorder %s118, %s120
      %p127 = scmp.eq.s32.totalorder %s28, 1
      %p128 = por %p126, %p127
      %p129 = scmp.ne.s32.totalorder %s120, %s121
      %p130 = scmp.eq.s32.totalorder %s28, 0
      %p131 = por %p129, %p130
      %p132 = scmp.ne.s32.totalorder %s120, %s121
      %p133 = scmp.eq.s32.totalorder %s29, 1
      %p134 = por %p132, %p133
      %p136 = scmp.ne.s32.totalorder %s121, %s135
      %p137 = scmp.eq.s32.totalorder %s29, 0
      %p138 = por %p136, %p137
      %s140 = sadd.s32 %s139, 1
      %p143 = scmp.eq.s32.totalorder %s23, 1
      %p144 = scmp.ne.s32.totalorder %s139, %s141
      %p145 = scmp.eq.s32.totalorder %s23, 0
      %p146 = por %p144, %p145
      %p147 = scmp.ne.s32.totalorder %s139, %s141
      %p148 = scmp.eq.s32.totalorder %s28, 1
      %p149 = por %p147, %p148
      %p150 = scmp.ne.s32.totalorder %s141, %s142
      %p151 = scmp.eq.s32.totalorder %s28, 0
      %p152 = por %p150, %p151
      %p153 = scmp.ne.s32.totalorder %s141, %s142
      %p154 = scmp.eq.s32.totalorder %s29, 1
      %p155 = por %p153, %p154
      %p157 = scmp.ne.s32.totalorder %s142, %s156
      %p158 = scmp.eq.s32.totalorder %s29, 0
      %p159 = por %p157, %p158
      %s161 = sadd.s32 %s160, 1
      %p164 = scmp.eq.s32.totalorder %s23, 1
      %p165 = scmp.ne.s32.totalorder %s160, %s162
      %p166 = scmp.eq.s32.totalorder %s23, 0
      %p167 = por %p165, %p166
      %p168 = scmp.ne.s32.totalorder %s160, %s162
      %p169 = scmp.eq.s32.totalorder %s28, 1
      %p170 = por %p168, %p169
      %p171 = scmp.ne.s32.totalorder %s162, %s163
      %p172 = scmp.eq.s32.totalorder %s28, 0
      %p173 = por %p171, %p172
      %p174 = scmp.ne.s32.totalorder %s162, %s163
      %p175 = scmp.eq.s32.totalorder %s29, 1
      %p176 = por %p174, %p175
      %p178 = scmp.ne.s32.totalorder %s163, %s177
      %p179 = scmp.eq.s32.totalorder %s29, 0
      %p180 = por %p178, %p179
      %s182 = sadd.s32 %s181, 1
      %p185 = scmp.eq.s32.totalorder %s23, 1
      %p186 = scmp.ne.s32.totalorder %s181, %s183
      %p187 = scmp.eq.s32.totalorder %s23, 0
      %p188 = por %p186, %p187
      %p189 = scmp.ne.s32.totalorder %s181, %s183
      %p190 = scmp.eq.s32.totalorder %s28, 1
      %p191 = por %p189, %p190
      %p192 = scmp.ne.s32.totalorder %s183, %s184
      %p193 = scmp.eq.s32.totalorder %s28, 0
      %p194 = por %p192, %p193
      %p195 = scmp.ne.s32.totalorder %s183, %s184
      %p196 = scmp.eq.s32.totalorder %s29, 1
      %p197 = por %p195, %p196
      %p199 = scmp.ne.s32.totalorder %s184, %s198
      %p200 = scmp.eq.s32.totalorder %s29, 0
      %p201 = por %p199, %p200
      %s202 = ssub.s32 %s30, %s42
      %s203 = ssub.s32 %s31, %s38
      %s204 = sor.u32 %s202, %s203
      %p205 = scmp.eq.s32.totalorder %s204, 0
      %s207 = sadd.s32 %s206, 1
      %s208 = scalar_select %p205, %s206, %s207
      %p211 = pneg %p205
      %p212 = scmp.eq.s32.totalorder %s23, 1
      %p213 = por %p211, %p212
      %p214 = scmp.ne.s32.totalorder %s206, %s209
      %p215 = scmp.eq.s32.totalorder %s23, 0
      %p216 = por %p214, %p215
      %p217 = scmp.ne.s32.totalorder %s206, %s209
      %p218 = scmp.eq.s32.totalorder %s28, 1
      %p219 = por %p217, %p218
      %p220 = scmp.ne.s32.totalorder %s209, %s210
      %p221 = scmp.eq.s32.totalorder %s28, 0
      %p222 = por %p220, %p221
      %p223 = scmp.ne.s32.totalorder %s209, %s210
      %p224 = scmp.eq.s32.totalorder %s29, 1
      %p225 = por %p223, %p224
      %p227 = scmp.ne.s32.totalorder %s210, %s226
      %p228 = scmp.eq.s32.totalorder %s29, 0
      %p229 = por %p227, %p228
      %p230 = scmp.le.s32.totalorder 1, %s23
      %p231 = scmp.lt.s32.totalorder %s23, 3
      %p232 = pnand %p230, %p231
      %p233 = pneg %p232
      // Predicated region
      $region9: #{tpu_custom_call.1} parent=5 // pred_check
        _
      $region10: #{tpu_custom_call.1} parent=5 // pred_check_branch
        %235 = sbr.rel (%p232) target = $region12
      $region11: #{tpu_custom_call.1} parent=5 // pred_region
        %s236 = ssub.s32 %s23, 1
        // Predicated region
        $region13: #{tpu_custom_call.1} parent=11 // pred_check
          %p237 = pneg %p110
        $region14: #{tpu_custom_call.1} parent=11 // pred_check_branch
          %239 = sbr.rel (%p237) target = $region16
        $region15: #{tpu_custom_call.1} parent=11 // pred_region
          %s241 = ssub.s32 256, 256
          %242 = vsyncadd [#allocation6], %s241
          %s243 = sshll.u32 [#allocation7], 4
          %s244 = int_to_ptr.vmem [resolvable:$true] %s243
          %249 = dma.hbm_to_vmem [thread:$0]  %s2, 256, %s244, [#allocation6], 64, 64, 4
        $region16: #{tpu_custom_call.1} parent=11 // pred_fallthru
          _
        // Predicated region
        $region17: #{tpu_custom_call.1} parent=11 // pred_check
          %p250 = pneg %p131
        $region18: #{tpu_custom_call.1} parent=11 // pred_check_branch
          %252 = sbr.rel (%p250) target = $region20
        $region19: #{tpu_custom_call.1} parent=11 // pred_region
          %s254 = ssub.s32 192, 192
          %255 = vsyncadd [#allocation9], %s254
          %s256 = sshll.u32 [#allocation8], 4
          %s257 = int_to_ptr.vmem [resolvable:$true] %s256
          %262 = dma.hbm_to_vmem [thread:$0]  %s3, 192, %s257, [#allocation9], 64, 64, 4
        $region20: #{tpu_custom_call.1} parent=11 // pred_fallthru
          _
        // Predicated region
        $region21: #{tpu_custom_call.1} parent=11 // pred_check
          %p263 = pneg %p152
        $region22: #{tpu_custom_call.1} parent=11 // pred_check_branch
          %265 = sbr.rel (%p263) target = $region24
        $region23: #{tpu_custom_call.1} parent=11 // pred_region
          _
        $region24: #{tpu_custom_call.1} parent=11 // pred_fallthru
          _
        // Predicated region
        $region25: #{tpu_custom_call.1} parent=11 // pred_check
          %p266 = pneg %p173
        $region26: #{tpu_custom_call.1} parent=11 // pred_check_branch
          %268 = sbr.rel (%p266) target = $region28
        $region27: #{tpu_custom_call.1} parent=11 // pred_region
          %s270 = ssub.s32 256, 256
          %271 = vsyncadd [#allocation9], %s270
          %s272 = sshll.u32 [#allocation10], 4
          %s273 = int_to_ptr.vmem [resolvable:$true] %s272
          %278 = dma.hbm_to_vmem [thread:$0]  %s5, 256, %s273, [#allocation9], 64, 64, 4
        $region28: #{tpu_custom_call.1} parent=11 // pred_fallthru
          _
        // Predicated region
        $region29: #{tpu_custom_call.1} parent=11 // pred_check
          %p279 = pneg %p194
        $region30: #{tpu_custom_call.1} parent=11 // pred_check_branch
          %281 = sbr.rel (%p279) target = $region32
        $region31: #{tpu_custom_call.1} parent=11 // pred_region
          _
        $region32: #{tpu_custom_call.1} parent=11 // pred_fallthru
          _
      $region12: #{tpu_custom_call.1} parent=5 // pred_fallthru
        _
      %p282 = scmp.lt.s32.totalorder %s23, 2
      // Predicated region
      $region33: #{tpu_custom_call.1} parent=5 // pred_check
        %p283 = pneg %p282
      $region34: #{tpu_custom_call.1} parent=5 // pred_check_branch
        %285 = sbr.rel (%p283) target = $region36
      $region35: #{tpu_custom_call.1} parent=5 // pred_region
        // Predicated region
        $region37: #{tpu_custom_call.1} parent=35 // pred_check
          %p286 = pneg %p57
        $region38: #{tpu_custom_call.1} parent=35 // pred_check_branch
          %288 = sbr.rel (%p286) target = $region40
        $region39: #{tpu_custom_call.1} parent=35 // pred_region
          %s289 = sand.u32 %s47, 1
          %s290 = scalar_lea.sflag [#allocation3], %s289
          %s291 = sand.u32 %s47, 1
          %s292 = smul.addr %s291, 4
          %s293 = scalar_lea.vmem [#allocation2], %s292
          %s295 = ssub.s32 64, 64
          %296 = vsyncadd %s290, %s295
          %s297 = sadd.s32 %s31, %s30
          %s298 = smul.addr %s297, 64
          %s299 = scalar_lea.hbm %s0, %s298
          %s301 = sshll.u32 %s293, 4
          %s302 = int_to_ptr.vmem [resolvable:$true] %s301
          %304 = dma.hbm_to_vmem [thread:$0]  %s299, 64, %s302, %s290
        $region40: #{tpu_custom_call.1} parent=35 // pred_fallthru
          _
        // Predicated region
        $region41: #{tpu_custom_call.1} parent=35 // pred_check
          %p305 = pneg %p83
        $region42: #{tpu_custom_call.1} parent=35 // pred_check_branch
          %307 = sbr.rel (%p305) target = $region44
        $region43: #{tpu_custom_call.1} parent=35 // pred_region
          %s308 = sand.u32 %s23, 1
          %s309 = scalar_lea.sflag [#allocation6], %s308
          %s310 = sand.u32 %s73, 1
          %s311 = smul.addr %s310, 4
          %s312 = scalar_lea.vmem [#allocation5], %s311
          %s314 = ssub.s32 64, 64
          %315 = vsyncadd %s309, %s314
          %s316 = smul.addr %s30, 64
          %s317 = scalar_lea.hbm %s1, %s316
          %s319 = sshll.u32 %s312, 4
          %s320 = int_to_ptr.vmem [resolvable:$true] %s319
          %322 = dma.hbm_to_vmem [thread:$0]  %s317, 64, %s320, %s309
        $region44: #{tpu_custom_call.1} parent=35 // pred_fallthru
          _
      $region36: #{tpu_custom_call.1} parent=5 // pred_fallthru
        _
      %p323 = scmp.le.s32.totalorder 1, %s23
      %p324 = scmp.lt.s32.totalorder %s23, 3
      %p325 = pnand %p323, %p324
      %p326 = pneg %p325
      // Predicated region
      $region45: #{tpu_custom_call.1} parent=5 // pred_check
        _
      $region46: #{tpu_custom_call.1} parent=5 // pred_check_branch
        %328 = sbr.rel (%p325) target = $region48
      $region47: #{tpu_custom_call.1} parent=5 // pred_region
        %s329 = ssub.s32 %s23, 1
        %s330 = sand.u32 %s50, 1
        %s331 = scalar_lea.sflag [#allocation3], %s330
        %s332 = sand.u32 %s50, 1
        %s333 = smul.addr %s332, 4
        %s334 = scalar_lea.vmem [#allocation2], %s333
        // Predicated region
        $region49: #{tpu_custom_call.1} parent=47 // pred_check
          %p335 = pneg %p63
        $region50: #{tpu_custom_call.1} parent=47 // pred_check_branch
          %337 = sbr.rel (%p335) target = $region52
        $region51: #{tpu_custom_call.1} parent=47 // pred_region
          %338 = dma.done %s331, 64
        $region52: #{tpu_custom_call.1} parent=47 // pred_fallthru
          _
        %s339 = sand.u32 %s28, 1
        %s340 = scalar_lea.sflag [#allocation6], %s339
        %s341 = sand.u32 %s76, 1
        %s342 = smul.addr %s341, 4
        %s343 = scalar_lea.vmem [#allocation5], %s342
        // Predicated region
        $region53: #{tpu_custom_call.1} parent=47 // pred_check
          %p344 = pneg %p89
        $region54: #{tpu_custom_call.1} parent=47 // pred_check_branch
          %346 = sbr.rel (%p344) target = $region56
        $region55: #{tpu_custom_call.1} parent=47 // pred_region
          %347 = dma.done %s340, 64
        $region56: #{tpu_custom_call.1} parent=47 // pred_fallthru
          _
        // Predicated region
        $region57: #{tpu_custom_call.1} parent=47 // pred_check
          %p348 = pneg %p110
        $region58: #{tpu_custom_call.1} parent=47 // pred_check_branch
          %350 = sbr.rel (%p348) target = $region60
        $region59: #{tpu_custom_call.1} parent=47 // pred_region
          %351 = dma.done [#allocation6], 256
        $region60: #{tpu_custom_call.1} parent=47 // pred_fallthru
          _
        // Predicated region
        $region61: #{tpu_custom_call.1} parent=47 // pred_check
          %p352 = pneg %p131
        $region62: #{tpu_custom_call.1} parent=47 // pred_check_branch
          %354 = sbr.rel (%p352) target = $region64
        $region63: #{tpu_custom_call.1} parent=47 // pred_region
          %355 = dma.done [#allocation9], 192
        $region64: #{tpu_custom_call.1} parent=47 // pred_fallthru
          _
        // Predicated region
        $region65: #{tpu_custom_call.1} parent=47 // pred_check
          %p356 = pneg %p173
        $region66: #{tpu_custom_call.1} parent=47 // pred_check_branch
          %358 = sbr.rel (%p356) target = $region68
        $region67: #{tpu_custom_call.1} parent=47 // pred_region
          %359 = dma.done [#allocation9], 256
        $region68: #{tpu_custom_call.1} parent=47 // pred_fallthru
          _
        %s360 = sand.u32 %s50, 1
        %s361 = scalar_lea.sflag [#allocation3], %s360
        %s362 = sand.u32 %s50, 1
        %s363 = smul.addr %s362, 4
        %s364 = scalar_lea.vmem [#allocation2], %s363
        %p365 = pneg %p63
        %p366 = pneg %p60
        %s367 = sand.u32 %s28, 1
        %s368 = scalar_lea.sflag [#allocation6], %s367
        %s369 = sand.u32 %s76, 1
        %s370 = smul.addr %s369, 4
        %s371 = scalar_lea.vmem [#allocation5], %s370
        %p372 = pneg %p89
        %p373 = pneg %p86
        %p374 = pneg %p110
        %p375 = pneg %p107
        %p376 = pneg %p131
        %p377 = pneg %p128
        %p378 = pneg %p152
        %p379 = pneg %p149
        %p380 = pneg %p173
        %p381 = pneg %p170
        %p382 = pneg %p194
        %p383 = pneg %p191
        %p384 = pneg %p222
        %p385 = pneg %p219
        %s386 = sand.u32 %s209, 1
        %s387 = scalar_lea.sflag [#allocation4], %s386
        %s388 = sand.u32 %s209, 1
        %s389 = smul.addr %s388, 64
        %s390 = scalar_lea.vmem [#allocation11], %s389
        %s391 = smul.u32 8, %s33
        %v393 = vld [vmem:[%s334] sm:$0xf]
        %v394 = vld [vmem:[%s343] sm:$0xf]
        %v395 = vld [vmem:[#allocation7] sm:$0xf]
        %v396 = vld [vmem:[#allocation7 + $0x4] sm:$0xf]
        %v397 = vld [vmem:[#allocation7 + $0x8] sm:$0xf]
        %v398 = vld [vmem:[#allocation7 + $0xc] sm:$0xf]
        %v403 = vunpack.c.l.b16 %v395
        %v404 = vunpack.c.l.b16 %v396
        %v405 = vunpack.c.l.b16 %v397
        %v406 = vunpack.c.l.b16 %v398
        %v407 = vpack.c.b16 %v404, %v403
        %v408 = vpack.c.b16 %v406, %v405
        %vm411 = vcmask 261120
        %v413 = vsel %vm411, %v393, 0
        %415 = vmatprep.subr.bf16.mxu0 0
        %416 = vmatpush1.bf16.msra.mxu0 0
        %417 = vmatprep.subr.bf16.mxu0 0
        %418 = vmatpush1.bf16.msra.mxu0 0
        %419 = vmatprep.subr.bf16.mxu0 0
        %420 = vmatpush1.bf16.msra.mxu0 0
        %421 = vmatprep.subr.bf16.mxu0 0
        %422 = vmatpush1.bf16.msra.mxu0 0
        %423 = vmatprep.subr.bf16.mxu0 0
        %424 = vmatpush1.bf16.msra.mxu0 0
        %425 = vmatprep.subr.bf16.mxu0 0
        %426 = vmatpush1.bf16.msra.mxu0 0
        %427 = vmatprep.subr.bf16.mxu0 0
        %428 = vmatpush1.bf16.msra.mxu0 %v408
        %429 = vmatprep.subr.bf16.mxu0 0
        %430 = vmatpush1.bf16.msra.mxu0 %v407
        %431 = vmatprep.subr.bf16.mxu0 0
        %432 = vmatpush2.bf16.msra.mxu0 0
        %433 = vmatprep.subr.bf16.mxu0 0
        %434 = vmatpush2.bf16.msra.mxu0 0
        %435 = vmatprep.subr.bf16.mxu0 0
        %436 = vmatpush2.bf16.msra.mxu0 0
        %437 = vmatprep.subr.bf16.mxu0 0
        %438 = vmatpush2.bf16.msra.mxu0 0
        %439 = vmatprep.subr.bf16.mxu0 0
        %440 = vmatpush2.bf16.msra.mxu0 0
        %441 = vmatprep.subr.bf16.mxu0 0
        %442 = vmatpush2.bf16.msra.mxu0 0
        %443 = vmatprep.subr.bf16.mxu0 0
        %444 = vmatpush2.bf16.msra.mxu0 0
        %445 = vmatprep.subr.bf16.mxu0 0
        %446 = vmatpush2.bf16.msra.mxu0 0
        %447 = vmatprep.mubr.bf16.mxu0 0
        %448 = vmatmul.mubr.bf16.gmra.mxu0 %v413
        %v449 = vpop.f32.mrf.mxu0
        %v450 = vadd.f32 0.0, %v449
        %v451 = vpop.f32.mrf.mxu0
        %v452 = vpop.f32.mrf.mxu0
        %v453 = vpop.f32.mrf.mxu0
        %454 = vdwg.mxu0
        %v455 = vld [vmem:[#allocation8] sm:$0xf]
        %v456 = vld [vmem:[#allocation8 + $0x4] sm:$0xf]
        %v457 = vld [vmem:[#allocation8 + $0x8] sm:$0xf]
        %v458 = vld [vmem:[%s4] sm:$0x1]
        %v460 = vlaneseq
        %v461 = vshrl.u32 %v460, 7
        %v462 = vsub.s32 0, %v461
        %v463 = vrot.slane %v458, %v462
        %v468 = vunpack.c.l.b16 %v455
        %v469 = vunpack.c.l.b16 %v456
        %v470 = vunpack.c.l.b16 %v457
        %v471 = vpack.c.b16 %v469, %v468
        %v472 = vpack.c.b16 %v470, %v470
        %vm474 = vcmask 195584
        %v476 = vsel %vm474, %v394, 0
        %vm478 = vcmask 1043456
        %v480 = vsel %vm478, %v472, 0
        %482 = vmatprep.subr.bf16.mxu0 0
        %483 = vmatpush1.bf16.msra.mxu0 0
        %484 = vmatprep.subr.bf16.mxu0 0
        %485 = vmatpush1.bf16.msra.mxu0 0
        %486 = vmatprep.subr.bf16.mxu0 0
        %487 = vmatpush1.bf16.msra.mxu0 0
        %488 = vmatprep.subr.bf16.mxu0 0
        %489 = vmatpush1.bf16.msra.mxu0 0
        %490 = vmatprep.subr.bf16.mxu0 0
        %491 = vmatpush1.bf16.msra.mxu0 0
        %492 = vmatprep.subr.bf16.mxu0 0
        %493 = vmatpush1.bf16.msra.mxu0 0
        %494 = vmatprep.subr.bf16.mxu0 0
        %495 = vmatpush1.bf16.msra.mxu0 %v480
        %496 = vmatprep.subr.bf16.mxu0 0
        %497 = vmatpush1.bf16.msra.mxu0 %v471
        %498 = vmatprep.subr.bf16.mxu0 0
        %499 = vmatpush2.bf16.msra.mxu0 0
        %500 = vmatprep.subr.bf16.mxu0 0
        %501 = vmatpush2.bf16.msra.mxu0 0
        %502 = vmatprep.subr.bf16.mxu0 0
        %503 = vmatpush2.bf16.msra.mxu0 0
        %504 = vmatprep.subr.bf16.mxu0 0
        %505 = vmatpush2.bf16.msra.mxu0 0
        %506 = vmatprep.subr.bf16.mxu0 0
        %507 = vmatpush2.bf16.msra.mxu0 0
        %508 = vmatprep.subr.bf16.mxu0 0
        %509 = vmatpush2.bf16.msra.mxu0 0
        %510 = vmatprep.subr.bf16.mxu0 0
        %511 = vmatpush2.bf16.msra.mxu0 0
        %512 = vmatprep.subr.bf16.mxu0 0
        %513 = vmatpush2.bf16.msra.mxu0 0
        %514 = vmatprep.mubr.bf16.mxu0 0
        %515 = vmatmul.mubr.bf16.gmra.mxu0 %v476
        %v516 = vpop.f32.mrf.mxu0
        %v517 = vadd.f32 %v463, %v516
        %v518 = vpop.f32.mrf.mxu0
        %v519 = vpop.f32.mrf.mxu0
        %v520 = vpop.f32.mrf.mxu0
        %521 = vdwg.mxu0
        %v522 = vld [vmem:[#allocation10] sm:$0xf]
        %v523 = vld [vmem:[#allocation10 + $0x4] sm:$0xf]
        %v524 = vld [vmem:[#allocation10 + $0x8] sm:$0xf]
        %v525 = vld [vmem:[#allocation10 + $0xc] sm:$0xf]
        %v526 = vld [vmem:[%s6] sm:$0x1]
        %v528 = vcombine.high %v450, %v450
        %v530 = vunpack.c.l.s4 1966171168
        %v531 = vunpack.c.0.s8 %v530
        %v532 = vlaneseq
        %v533 = vshrl.u32 %v532, 7
        %v534 = vsub.s32 %v531, %v533
        %v535 = vrot.slane %v450, %v534
        %v537 = vunpack.c.l.s4 1966171168
        %v538 = vunpack.c.0.s8 %v537
        %v539 = vlaneseq
        %v540 = vshrl.u32 %v539, 7
        %v541 = vsub.s32 %v538, %v540
        %v542 = vrot.slane %v528, %v541
        %v543 = vcombine.high %v535, %v535
        %v544 = vcombine.high %v542, %v542
        %v546 = vunpack.c.l.s4 1966171168
        %v547 = vunpack.c.0.s8 %v546
        %v548 = vlaneseq
        %v549 = vshrl.u32 %v548, 7
        %v550 = vsub.s32 %v547, %v549
        %v551 = vrot.slane %v535, %v550
        %v553 = vunpack.c.l.s4 1966171168
        %v554 = vunpack.c.0.s8 %v553
        %v555 = vlaneseq
        %v556 = vshrl.u32 %v555, 7
        %v557 = vsub.s32 %v554, %v556
        %v558 = vrot.slane %v542, %v557
        %v560 = vunpack.c.l.s4 1966171168
        %v561 = vunpack.c.0.s8 %v560
        %v562 = vlaneseq
        %v563 = vshrl.u32 %v562, 7
        %v564 = vsub.s32 %v561, %v563
        %v565 = vrot.slane %v543, %v564
        %v567 = vunpack.c.l.s4 1966171168
        %v568 = vunpack.c.0.s8 %v567
        %v569 = vlaneseq
        %v570 = vshrl.u32 %v569, 7
        %v571 = vsub.s32 %v568, %v570
        %v572 = vrot.slane %v544, %v571
        %v573 = vcombine.high %v551, %v551
        %v574 = vcombine.high %v558, %v558
        %v575 = vcombine.high %v565, %v565
        %v576 = vcombine.high %v572, %v572
        %v577 = vlaneseq
        %v578 = vshrl.u32 %v577, 7
        %v579 = vsub.s32 0, %v578
        %v580 = vrot.slane %v551, %v579
        %v581 = vlaneseq
        %v582 = vshrl.u32 %v581, 7
        %v583 = vsub.s32 0, %v582
        %v584 = vrot.slane %v565, %v583
        %v585 = vlaneseq
        %v586 = vshrl.u32 %v585, 7
        %v587 = vsub.s32 0, %v586
        %v588 = vrot.slane %v573, %v587
        %v589 = vlaneseq
        %v590 = vshrl.u32 %v589, 7
        %v591 = vsub.s32 0, %v590
        %v592 = vrot.slane %v575, %v591
        %v593 = vlaneseq
        %v594 = vshrl.u32 %v593, 7
        %v595 = vsub.s32 0, %v594
        %v596 = vrot.slane %v558, %v595
        %v597 = vlaneseq
        %v598 = vshrl.u32 %v597, 7
        %v599 = vsub.s32 0, %v598
        %v600 = vrot.slane %v572, %v599
        %v601 = vlaneseq
        %v602 = vshrl.u32 %v601, 7
        %v603 = vsub.s32 0, %v602
        %v604 = vrot.slane %v574, %v603
        %v605 = vlaneseq
        %v606 = vshrl.u32 %v605, 7
        %v607 = vsub.s32 0, %v606
        %v608 = vrot.slane %v576, %v607
        %v617 = vadd.f32 %v580, %v517
        %v618 = vadd.f32 %v584, %v517
        %v619 = vadd.f32 %v588, %v517
        %v620 = vadd.f32 %v592, %v517
        %v621 = vadd.f32 %v596, %v517
        %v622 = vadd.f32 %v600, %v517
        %v623 = vadd.f32 %v604, %v517
        %v624 = vadd.f32 %v608, %v517
        %v625 = vmax.f32 %v617, 0.0
        %v626 = vmax.f32 %v618, 0.0
        %v627 = vmax.f32 %v619, 0.0
        %v628 = vmax.f32 %v620, 0.0
        %v629 = vmax.f32 %v621, 0.0
        %v630 = vmax.f32 %v622, 0.0
        %v631 = vmax.f32 %v623, 0.0
        %v632 = vmax.f32 %v624, 0.0
        %v633 = vpack.c.bf16 %v626, %v625
        %v634 = vpack.c.bf16 %v628, %v627
        %v635 = vpack.c.bf16 %v630, %v629
        %v636 = vpack.c.bf16 %v632, %v631
        %v638 = vlaneseq
        %v639 = vshrl.u32 %v638, 7
        %v640 = vsub.s32 0, %v639
        %v641 = vrot.slane %v526, %v640
        %v647 = vunpack.c.l.b16 %v522
        %v648 = vunpack.c.l.b16 %v523
        %v649 = vunpack.c.l.b16 %v524
        %v650 = vunpack.c.l.b16 %v525
        %v651 = vpack.c.b16 %v648, %v647
        %v652 = vpack.c.b16 %v650, %v649
        %v656 = vsel %vm411, %v633, 0
        %v659 = vsel %vm411, %v634, 0
        %v662 = vsel %vm411, %v635, 0
        %v665 = vsel %vm411, %v636, 0
        %667 = vmatprep.subr.bf16.mxu0 0
        %668 = vmatpush1.bf16.msra.mxu0 0
        %669 = vmatprep.subr.bf16.mxu0 0
        %670 = vmatpush1.bf16.msra.mxu0 0
        %671 = vmatprep.subr.bf16.mxu0 0
        %672 = vmatpush1.bf16.msra.mxu0 0
        %673 = vmatprep.subr.bf16.mxu0 0
        %674 = vmatpush1.bf16.msra.mxu0 0
        %675 = vmatprep.subr.bf16.mxu0 0
        %676 = vmatpush1.bf16.msra.mxu0 0
        %677 = vmatprep.subr.bf16.mxu0 0
        %678 = vmatpush1.bf16.msra.mxu0 0
        %679 = vmatprep.subr.bf16.mxu0 0
        %680 = vmatpush1.bf16.msra.mxu0 %v652
        %681 = vmatprep.subr.bf16.mxu0 0
        %682 = vmatpush1.bf16.msra.mxu0 %v651
        %683 = vmatprep.subr.bf16.mxu0 0
        %684 = vmatpush2.bf16.msra.mxu0 0
        %685 = vmatprep.subr.bf16.mxu0 0
        %686 = vmatpush2.bf16.msra.mxu0 0
        %687 = vmatprep.subr.bf16.mxu0 0
        %688 = vmatpush2.bf16.msra.mxu0 0
        %689 = vmatprep.subr.bf16.mxu0 0
        %690 = vmatpush2.bf16.msra.mxu0 0
        %691 = vmatprep.subr.bf16.mxu0 0
        %692 = vmatpush2.bf16.msra.mxu0 0
        %693 = vmatprep.subr.bf16.mxu0 0
        %694 = vmatpush2.bf16.msra.mxu0 0
        %695 = vmatprep.subr.bf16.mxu0 0
        %696 = vmatpush2.bf16.msra.mxu0 0
        %697 = vmatprep.subr.bf16.mxu0 0
        %698 = vmatpush2.bf16.msra.mxu0 0
        %699 = vmatprep.mubr.bf16.mxu0 0
        %700 = vmatmul.mubr.bf16.gmra.mxu0 %v656
        %v701 = vpop.f32.mrf.mxu0
        %v702 = vadd.f32 %v641, %v701
        %v703 = vpop.f32.mrf.mxu0
        %v704 = vpop.f32.mrf.mxu0
        %v705 = vadd.f32 %v641, %v704
        %v706 = vpop.f32.mrf.mxu0
        %707 = vmatprep.mubr.bf16.mxu0 0
        %708 = vmatmul.mubr.bf16.gmra.mxu0 %v659
        %v709 = vpop.f32.mrf.mxu0
        %v710 = vadd.f32 %v641, %v709
        %v711 = vpop.f32.mrf.mxu0
        %v712 = vpop.f32.mrf.mxu0
        %v713 = vadd.f32 %v641, %v712
        %v714 = vpop.f32.mrf.mxu0
        %715 = vmatprep.mubr.bf16.mxu0 0
        %716 = vmatmul.mubr.bf16.gmra.mxu0 %v662
        %v717 = vpop.f32.mrf.mxu0
        %v718 = vadd.f32 %v641, %v717
        %v719 = vpop.f32.mrf.mxu0
        %v720 = vpop.f32.mrf.mxu0
        %v721 = vadd.f32 %v641, %v720
        %v722 = vpop.f32.mrf.mxu0
        %723 = vmatprep.mubr.bf16.mxu0 0
        %724 = vmatmul.mubr.bf16.gmra.mxu0 %v665
        %v725 = vpop.f32.mrf.mxu0
        %v726 = vadd.f32 %v641, %v725
        %v727 = vpop.f32.mrf.mxu0
        %v728 = vpop.f32.mrf.mxu0
        %v729 = vadd.f32 %v641, %v728
        %v730 = vpop.f32.mrf.mxu0
        %731 = vdwg.mxu0
        %732 = vst [vmem:[%s390] sm:$0xff] %v702
        %733 = vst [vmem:[%s390 + $0x8] sm:$0xff] %v705
        %734 = vst [vmem:[%s390 + $0x10] sm:$0xff] %v710
        %735 = vst [vmem:[%s390 + $0x18] sm:$0xff] %v713
        %736 = vst [vmem:[%s390 + $0x20] sm:$0xff] %v718
        %737 = vst [vmem:[%s390 + $0x28] sm:$0xff] %v721
        %738 = vst [vmem:[%s390 + $0x30] sm:$0xff] %v726
        %739 = vst [vmem:[%s390 + $0x38] sm:$0xff] %v729
        %s740 = sand.u32 %s209, 1
        %s741 = scalar_lea.sflag [#allocation4], %s740
        %s742 = sand.u32 %s209, 1
        %s743 = smul.addr %s742, 64
        %s744 = scalar_lea.vmem [#allocation11], %s743
        // Predicated region
        $region69: #{tpu_custom_call.1} parent=47 // pred_check
          %p745 = pneg %p219
        $region70: #{tpu_custom_call.1} parent=47 // pred_check_branch
          %747 = sbr.rel (%p745) target = $region72
        $region71: #{tpu_custom_call.1} parent=47 // pred_region
          %s748 = smul.u32 8, %s33
          %s750 = ssub.s32 1024, 1024
          %751 = vsyncadd %s741, %s750
          %s752 = smul.addr %s32, 8
          %s753 = sadd.s32 %s748, %s752
          %s754 = smul.addr %s753, 128
          %s755 = scalar_lea.hbm %s7, %s754
          %s756 = sshll.u32 %s744, 4
          %s757 = int_to_ptr.vmem [resolvable:$true] %s756
          %762 = dma.vmem_to_hbm [thread:$0]  %s757, 1024, %s755, %s741, 128, 128, 8
        $region72: #{tpu_custom_call.1} parent=47 // pred_fallthru
          _
      $region48: #{tpu_custom_call.1} parent=5 // pred_fallthru
        _
      %p763 = scmp.le.s32.totalorder 2, %s23
      // Predicated region
      $region73: #{tpu_custom_call.1} parent=5 // pred_check
        %p764 = pneg %p763
      $region74: #{tpu_custom_call.1} parent=5 // pred_check_branch
        %766 = sbr.rel (%p764) target = $region76
      $region75: #{tpu_custom_call.1} parent=5 // pred_region
        %s767 = ssub.s32 %s23, 2
        // Predicated region
        $region77: #{tpu_custom_call.1} parent=75 // pred_check
          %p768 = pneg %p225
        $region78: #{tpu_custom_call.1} parent=75 // pred_check_branch
          %770 = sbr.rel (%p768) target = $region80
        $region79: #{tpu_custom_call.1} parent=75 // pred_region
          %s771 = sand.u32 %s210, 1
          %s772 = scalar_lea.sflag [#allocation4], %s771
          %s773 = sand.u32 %s210, 1
          %s774 = smul.addr %s773, 64
          %s775 = scalar_lea.vmem [#allocation11], %s774
          %776 = dma.done %s772, 1024
        $region80: #{tpu_custom_call.1} parent=75 // pred_fallthru
          _
      $region76: #{tpu_custom_call.1} parent=5 // pred_fallthru
        _
    $region6: #{tpu_custom_call.1} parent=1 // loop_footer
      %s27 = sadd.s32 1, %s23
    $region7: #{tpu_custom_call.1} parent=1 // loop_footer_branch
      %22 = sbr.rel target = $region3
    $region8: #{tpu_custom_call.1} parent=1 // loop_exit
      _
    %777 = vsyncpa [#allocation3], 1
    %s778 = scalar_lea.sflag [#allocation3], 1
    %779 = vsyncpa %s778, 1
    %780 = vsyncpa [#allocation6], 1
    %s781 = scalar_lea.sflag [#allocation6], 1
    %782 = vsyncpa %s781, 1
    %783 = vsyncpa [#allocation9], 1
    %784 = vsyncpa [#allocation4], 1
    %s785 = scalar_lea.sflag [#allocation4], 1
    %786 = vsyncpa %s785, 1

</llo_original>
